<compile_context>
chip_gen: v7x
topology: tpu7x:2x2x1
jax: 0.10.0
libtpu: 0.0.40
codegen_flags: <defaults>
</compile_context>

<pallas_src>
import functools

import jax
import jax.numpy as jnp
from jax.experimental import pallas as pl
from jax.experimental.pallas import tpu as pltpu


KS = 3
EPS = 1e-5
VMEM_LIMIT = 32 * 1024 * 1024   # explicit scoped-VMEM budget (valid on v5e..v7x)


def _conv_row_tile(x_ref, w_ref, row0, th):
    """3x3 conv for one TH-row output slab of one padded NHWC image.

    x_ref: (Hp, Wp, Cin) bf16   whole padded image, resident in VMEM
    w_ref: (KS, KS*Cin, Cout) bf16 with w_ref[dx][(dy*Cin+ci), co] = weight[co,ci,dy,dx]
    row0 : first output row of this slab (dynamic scalar)
    Returns (TH*W, Cout) f32.

    The 3 dx (W-axis) shifts become 3 accumulating MXU matmuls with K = 3*Cin;
    only the 3 dy-shifted slices (pure offsets along the outer H axis) are
    concatenated, avoiding the previous 9-way lane-axis concat slab.
    """
    _, wp, cin = x_ref.shape
    w_out = wp - (KS - 1)
    acc = None
    for dx in range(KS):
        cols = [x_ref[pl.ds(row0 + dy, th), pl.ds(dx, w_out), :] for dy in range(KS)]
        patch = jnp.concatenate(cols, axis=-1).reshape(th * w_out, KS * cin)
        part = jnp.dot(patch, w_ref[dx], preferred_element_type=jnp.float32)
        acc = part if acc is None else acc + part
    return acc


def conv_stats_kernel(x_ref, w_ref, stats_ref, *, th):
    """Pass 1: conv for this row slab, accumulate per-channel [sum, sumsq].

    stats_ref (2, Cout) is the same resident output block for every row tile of an
    image (index_map ignores the row axis), so init at r==0 and accumulate.
    """
    r = pl.program_id(1)
    row0 = pl.multiple_of(r * th, th)
    acc = _conv_row_tile(x_ref, w_ref, row0, th)            # (TH*W, Cout) f32
    s = jnp.sum(acc, axis=0, keepdims=True)                 # (1, Cout)
    sq = jnp.sum(acc * acc, axis=0, keepdims=True)          # (1, Cout)
    part = jnp.concatenate([s, sq], axis=0)                 # (2, Cout)

    @pl.when(r == 0)
    def _():
        stats_ref[...] = jnp.zeros_like(stats_ref)

    stats_ref[...] += part


def conv_affine_relu_kernel(x_ref, w_ref, scale_ref, shift_ref, o_ref, *, th):
    """Pass 2: recompute conv for this row slab, folded BN affine + ReLU, bf16 store."""
    r = pl.program_id(1)
    row0 = pl.multiple_of(r * th, th)
    acc = _conv_row_tile(x_ref, w_ref, row0, th)            # (TH*W, Cout) f32
    y = jnp.maximum(acc * scale_ref[...] + shift_ref[...], 0.0)
    o_ref[...] = y.astype(o_ref.dtype).reshape(o_ref.shape)  # (TH, W, Cout) bf16


def conv_bn_relu(x_nchw, weight_oihw, gamma, beta, eps=EPS, row_tile=8):
    """ConvBNReLU forward. x: (N, Cin, H, W) f32. weight: (Cout, Cin, 3, 3)."""
    N, Cin, H, W = x_nchw.shape
    Cout = weight_oihw.shape[0]
    Hp, Wp = H + KS - 1, W + KS - 1

    # Row-tile height: largest divisor of H that is <= row_tile.
    th = min(row_tile, H)
    while H % th:
        th -= 1
    n_rt = H // th

    # NCHW -> NHWC, 1-pixel spatial pad, bf16 for the MXU (one fused XLA op).
    x = jnp.transpose(x_nchw, (0, 2, 3, 1))
    x_pad = jnp.pad(x, ((0, 0), (1, 1), (1, 1), (0, 0))).astype(jnp.bfloat16)

    # (Cout, Cin, dy, dx) -> (dx, dy*Cin, Cout): one K=3*Cin weight slab per dx shift.
    w = jnp.transpose(weight_oihw, (3, 2, 1, 0)).reshape(KS, KS * Cin, Cout)
    w = w.astype(jnp.bfloat16)

    # Whole padded image resident across the row axis (index_map ignores r).
    x_spec = pl.BlockSpec((None, Hp, Wp, Cin), lambda n, r: (n, 0, 0, 0))
    w_spec = pl.BlockSpec((KS, KS * Cin, Cout), lambda n, r: (0, 0, 0))

    # ---- pass 1: per-image [sum, sumsq], accumulated in VMEM across row tiles ----
    stats = pl.pallas_call(
        functools.partial(conv_stats_kernel, th=th),
        out_shape=jax.ShapeDtypeStruct((N, 2, Cout), jnp.float32),
        grid=(N, n_rt),
        in_specs=[x_spec, w_spec],
        out_specs=pl.BlockSpec((None, 2, Cout), lambda n, r: (n, 0, 0)),
        compiler_params=pltpu.CompilerParams(
            dimension_semantics=("parallel", "arbitrary"),
            vmem_limit_bytes=VMEM_LIMIT),
    )(x_pad, w)

    # ---- fold BatchNorm (biased batch stats) into one affine: y = acc*scale+shift ----
    count = jnp.float32(N * H * W)
    total = jnp.sum(stats, axis=0)                           # (2, Cout)
    mean = total[0] / count
    var = jnp.maximum(total[1] / count - mean * mean, 0.0)   # biased variance
    scale = (gamma.astype(jnp.float32) * jax.lax.rsqrt(var + eps)).reshape(1, Cout)
    shift = (beta.astype(jnp.float32) - mean * scale[0]).reshape(1, Cout)

    # ---- pass 2: recompute conv + affine + ReLU, bf16 row-slab stores ----
    out_nhwc = pl.pallas_call(
        functools.partial(conv_affine_relu_kernel, th=th),
        out_shape=jax.ShapeDtypeStruct((N, H, W, Cout), jnp.bfloat16),
        grid=(N, n_rt),
        in_specs=[x_spec, w_spec,
                  pl.BlockSpec((1, Cout), lambda n, r: (0, 0)),
                  pl.BlockSpec((1, Cout), lambda n, r: (0, 0))],
        out_specs=pl.BlockSpec((None, th, W, Cout), lambda n, r: (n, r, 0, 0)),
        compiler_params=pltpu.CompilerParams(
            dimension_semantics=("parallel", "parallel"),
            vmem_limit_bytes=VMEM_LIMIT),
    )(x_pad, w, scale, shift)

    # Back to the module's NCHW f32 convention (kept NHWC inside the kernels).
    return jnp.transpose(out_nhwc, (0, 3, 1, 2)).astype(jnp.float32)


def reference(x_nchw, weight_oihw, gamma, beta):
    y = jax.lax.conv_general_dilated(
        x_nchw, weight_oihw, window_strides=(1, 1),
        padding=((1, 1), (1, 1)),
        dimension_numbers=("NCHW", "OIHW", "NCHW"),
    )
    mean = jnp.mean(y, axis=(0, 2, 3), keepdims=True)
    var = jnp.mean((y - mean) ** 2, axis=(0, 2, 3), keepdims=True)
    yn = (y - mean) * jax.lax.rsqrt(var + EPS)
    yn = yn * gamma.reshape(1, -1, 1, 1) + beta.reshape(1, -1, 1, 1)
    return jnp.maximum(yn, 0.0)


if __name__ == "__main__":
    key = jax.random.PRNGKey(0)
    kx, kw = jax.random.split(key)

    N, Cin, Cout, H, W = 2, 4, 8, 16, 16

    x = jax.random.normal(kx, (N, Cin, H, W), dtype=jnp.float32)

    # kaiming_normal_(a=1): gain = sqrt(2/(1+a^2)) = 1, fan_in = Cin*ks*ks
    fan_in = Cin * KS * KS
    std = 1.0 / jnp.sqrt(jnp.float32(fan_in))
    weight = jax.random.normal(kw, (Cout, Cin, KS, KS), dtype=jnp.float32) * std

    # Fresh BatchNorm2d: weight=1, bias=0
    gamma = jnp.ones((Cout,), jnp.float32)
    beta = jnp.zeros((Cout,), jnp.float32)

    out = jax.block_until_ready(conv_bn_relu(x, weight, gamma, beta))
    ref = jax.block_until_ready(reference(x, weight, gamma, beta))

    assert out.shape == (N, Cout, H, W)
    # bf16 MXU inputs + bf16 output store -> slightly looser tolerance than pure f32
    err = float(jnp.max(jnp.abs(out - ref)))
    assert jnp.allclose(out, ref, rtol=2e-2, atol=2e-2), f"mismatch vs reference: {err}"

    print("KERNEL_OK")
</pallas_src>

<mosaic_0001>
module attributes {stable_mosaic.version = 11 : i64} {
  func.func @conv_stats_kernel(%arg0: i32, %arg1: i32, %arg2: memref<1x18x18x4xbf16, #tpu.memory_space<vmem>>, %arg3: memref<3x12x8xbf16, #tpu.memory_space<vmem>>, %arg4: memref<1x2x8xf32, #tpu.memory_space<vmem>>) attributes {dimension_semantics = [#tpu.dimension_semantics<parallel>, #tpu.dimension_semantics<arbitrary>], iteration_bounds = array<i64: 2, 2>, scalar_prefetch = 0 : i64, scratch_operands = 0 : i64, tpu.core_type = #tpu.core_type<tc>, window_params = [{transform_indices = @transform_0, window_bounds = array<i64: 1, 18, 18, 4>}, {pipeline_mode = #tpu.pipeline_mode<synchronous>, transform_indices = @transform_1, window_bounds = array<i64: 3, 12, 8>}, {transform_indices = @transform_2, window_bounds = array<i64: 1, 2, 8>}]} {
    %c8_i32 = arith.constant 8 : i32
    %0 = arith.muli %arg1, %c8_i32 : i32
    %1 = tpu.assume_multiple %0, 8 : i32
    %c0_i32 = arith.constant 0 : i32
    %2 = arith.addi %1, %c0_i32 : i32
    %c0 = arith.constant 0 : index
    %3 = arith.index_cast %2 : i32 to index
    %c0_0 = arith.constant 0 : index
    %c0_1 = arith.constant 0 : index
    %4 = vector.load %arg2[%c0, %3, %c0_0, %c0_1] : memref<1x18x18x4xbf16, #tpu.memory_space<vmem>>, vector<1x8x16x4xbf16>
    %5 = vector.shape_cast %4 : vector<1x8x16x4xbf16> to vector<8x16x4xbf16>
    %c1_i32 = arith.constant 1 : i32
    %6 = arith.addi %1, %c1_i32 : i32
    %c0_2 = arith.constant 0 : index
    %7 = arith.index_cast %6 : i32 to index
    %c0_3 = arith.constant 0 : index
    %c0_4 = arith.constant 0 : index
    %8 = vector.load %arg2[%c0_2, %7, %c0_3, %c0_4] : memref<1x18x18x4xbf16, #tpu.memory_space<vmem>>, vector<1x8x16x4xbf16>
    %9 = vector.shape_cast %8 : vector<1x8x16x4xbf16> to vector<8x16x4xbf16>
    %c2_i32 = arith.constant 2 : i32
    %10 = arith.addi %1, %c2_i32 : i32
    %c0_5 = arith.constant 0 : index
    %11 = arith.index_cast %10 : i32 to index
    %c0_6 = arith.constant 0 : index
    %c0_7 = arith.constant 0 : index
    %12 = vector.load %arg2[%c0_5, %11, %c0_6, %c0_7] : memref<1x18x18x4xbf16, #tpu.memory_space<vmem>>, vector<1x8x16x4xbf16>
    %13 = vector.shape_cast %12 : vector<1x8x16x4xbf16> to vector<8x16x4xbf16>
    %14 = tpu.concatenate %5, %9, %13 in 2 : vector<8x16x4xbf16>, vector<8x16x4xbf16>, vector<8x16x4xbf16> -> vector<8x16x12xbf16>
    %15 = vector.shape_cast %14 : vector<8x16x12xbf16> to vector<128x12xbf16>
    %c0_8 = arith.constant 0 : index
    %c0_9 = arith.constant 0 : index
    %c0_10 = arith.constant 0 : index
    %16 = vector.load %arg3[%c0_8, %c0_9, %c0_10] : memref<3x12x8xbf16, #tpu.memory_space<vmem>>, vector<1x12x8xbf16>
    %17 = vector.shape_cast %16 : vector<1x12x8xbf16> to vector<12x8xbf16>
    %cst = arith.constant dense<0.000000e+00> : vector<128x8xf32>
    %18 = tpu.matmul %15, %17, %cst {dimension_numbers = #tpu.dot_dimension_numbers<[1], [0], [0], [1], [0, 0, 1, 1], [], []>} : vector<128x12xbf16>, vector<12x8xbf16>, vector<128x8xf32> -> vector<128x8xf32>
    %c0_i32_11 = arith.constant 0 : i32
    %19 = arith.addi %1, %c0_i32_11 : i32
    %c0_12 = arith.constant 0 : index
    %20 = arith.index_cast %19 : i32 to index
    %c1 = arith.constant 1 : index
    %c0_13 = arith.constant 0 : index
    %21 = vector.load %arg2[%c0_12, %20, %c1, %c0_13] : memref<1x18x18x4xbf16, #tpu.memory_space<vmem>>, vector<1x8x16x4xbf16>
    %22 = vector.shape_cast %21 : vector<1x8x16x4xbf16> to vector<8x16x4xbf16>
    %c1_i32_14 = arith.constant 1 : i32
    %23 = arith.addi %1, %c1_i32_14 : i32
    %c0_15 = arith.constant 0 : index
    %24 = arith.index_cast %23 : i32 to index
    %c1_16 = arith.constant 1 : index
    %c0_17 = arith.constant 0 : index
    %25 = vector.load %arg2[%c0_15, %24, %c1_16, %c0_17] : memref<1x18x18x4xbf16, #tpu.memory_space<vmem>>, vector<1x8x16x4xbf16>
    %26 = vector.shape_cast %25 : vector<1x8x16x4xbf16> to vector<8x16x4xbf16>
    %c2_i32_18 = arith.constant 2 : i32
    %27 = arith.addi %1, %c2_i32_18 : i32
    %c0_19 = arith.constant 0 : index
    %28 = arith.index_cast %27 : i32 to index
    %c1_20 = arith.constant 1 : index
    %c0_21 = arith.constant 0 : index
    %29 = vector.load %arg2[%c0_19, %28, %c1_20, %c0_21] : memref<1x18x18x4xbf16, #tpu.memory_space<vmem>>, vector<1x8x16x4xbf16>
    %30 = vector.shape_cast %29 : vector<1x8x16x4xbf16> to vector<8x16x4xbf16>
    %31 = tpu.concatenate %22, %26, %30 in 2 : vector<8x16x4xbf16>, vector<8x16x4xbf16>, vector<8x16x4xbf16> -> vector<8x16x12xbf16>
    %32 = vector.shape_cast %31 : vector<8x16x12xbf16> to vector<128x12xbf16>
    %c1_22 = arith.constant 1 : index
    %c0_23 = arith.constant 0 : index
    %c0_24 = arith.constant 0 : index
    %33 = vector.load %arg3[%c1_22, %c0_23, %c0_24] : memref<3x12x8xbf16, #tpu.memory_space<vmem>>, vector<1x12x8xbf16>
    %34 = vector.shape_cast %33 : vector<1x12x8xbf16> to vector<12x8xbf16>
    %cst_25 = arith.constant dense<0.000000e+00> : vector<128x8xf32>
    %35 = tpu.matmul %32, %34, %cst_25 {dimension_numbers = #tpu.dot_dimension_numbers<[1], [0], [0], [1], [0, 0, 1, 1], [], []>} : vector<128x12xbf16>, vector<12x8xbf16>, vector<128x8xf32> -> vector<128x8xf32>
    %36 = arith.addf %18, %35 : vector<128x8xf32>
    %c0_i32_26 = arith.constant 0 : i32
    %37 = arith.addi %1, %c0_i32_26 : i32
    %c0_27 = arith.constant 0 : index
    %38 = arith.index_cast %37 : i32 to index
    %c2 = arith.constant 2 : index
    %c0_28 = arith.constant 0 : index
    %39 = vector.load %arg2[%c0_27, %38, %c2, %c0_28] : memref<1x18x18x4xbf16, #tpu.memory_space<vmem>>, vector<1x8x16x4xbf16>
    %40 = vector.shape_cast %39 : vector<1x8x16x4xbf16> to vector<8x16x4xbf16>
    %c1_i32_29 = arith.constant 1 : i32
    %41 = arith.addi %1, %c1_i32_29 : i32
    %c0_30 = arith.constant 0 : index
    %42 = arith.index_cast %41 : i32 to index
    %c2_31 = arith.constant 2 : index
    %c0_32 = arith.constant 0 : index
    %43 = vector.load %arg2[%c0_30, %42, %c2_31, %c0_32] : memref<1x18x18x4xbf16, #tpu.memory_space<vmem>>, vector<1x8x16x4xbf16>
    %44 = vector.shape_cast %43 : vector<1x8x16x4xbf16> to vector<8x16x4xbf16>
    %c2_i32_33 = arith.constant 2 : i32
    %45 = arith.addi %1, %c2_i32_33 : i32
    %c0_34 = arith.constant 0 : index
    %46 = arith.index_cast %45 : i32 to index
    %c2_35 = arith.constant 2 : index
    %c0_36 = arith.constant 0 : index
    %47 = vector.load %arg2[%c0_34, %46, %c2_35, %c0_36] : memref<1x18x18x4xbf16, #tpu.memory_space<vmem>>, vector<1x8x16x4xbf16>
    %48 = vector.shape_cast %47 : vector<1x8x16x4xbf16> to vector<8x16x4xbf16>
    %49 = tpu.concatenate %40, %44, %48 in 2 : vector<8x16x4xbf16>, vector<8x16x4xbf16>, vector<8x16x4xbf16> -> vector<8x16x12xbf16>
    %50 = vector.shape_cast %49 : vector<8x16x12xbf16> to vector<128x12xbf16>
    %c2_37 = arith.constant 2 : index
    %c0_38 = arith.constant 0 : index
    %c0_39 = arith.constant 0 : index
    %51 = vector.load %arg3[%c2_37, %c0_38, %c0_39] : memref<3x12x8xbf16, #tpu.memory_space<vmem>>, vector<1x12x8xbf16>
    %52 = vector.shape_cast %51 : vector<1x12x8xbf16> to vector<12x8xbf16>
    %cst_40 = arith.constant dense<0.000000e+00> : vector<128x8xf32>
    %53 = tpu.matmul %50, %52, %cst_40 {dimension_numbers = #tpu.dot_dimension_numbers<[1], [0], [0], [1], [0, 0, 1, 1], [], []>} : vector<128x12xbf16>, vector<12x8xbf16>, vector<128x8xf32> -> vector<128x8xf32>
    %54 = arith.addf %36, %53 : vector<128x8xf32>
    %cst_41 = arith.constant dense<0.000000e+00> : vector<8xf32>
    %55 = vector.multi_reduction <add>, %54, %cst_41 [0] : vector<128x8xf32> to vector<8xf32>
    %56 = vector.shape_cast %55 : vector<8xf32> to vector<1x8xf32>
    %57 = arith.mulf %54, %54 : vector<128x8xf32>
    %cst_42 = arith.constant dense<0.000000e+00> : vector<8xf32>
    %58 = vector.multi_reduction <add>, %57, %cst_42 [0] : vector<128x8xf32> to vector<8xf32>
    %59 = vector.shape_cast %58 : vector<8xf32> to vector<1x8xf32>
    %60 = tpu.concatenate %56, %59 in 0 : vector<1x8xf32>, vector<1x8xf32> -> vector<2x8xf32>
    %c0_i32_43 = arith.constant 0 : i32
    %61 = arith.cmpi eq, %arg1, %c0_i32_43 : i32
    %62 = arith.extui %61 : i1 to i32
    %c0_i32_44 = arith.constant 0 : i32
    %63 = arith.cmpi ne, %62, %c0_i32_44 : i32
    scf.if %63 {
      %cst_51 = arith.constant 0.000000e+00 : f32
      %70 = vector.broadcast %cst_51 : f32 to vector<2x8xf32>
      %c0_52 = arith.constant 0 : index
      %c0_53 = arith.constant 0 : index
      %c0_54 = arith.constant 0 : index
      %71 = vector.load %arg4[%c0_52, %c0_53, %c0_54] : memref<1x2x8xf32, #tpu.memory_space<vmem>>, vector<1x2x8xf32>
      %72 = vector.shape_cast %71 : vector<1x2x8xf32> to vector<2x8xf32>
      %73 = vector.shape_cast %70 : vector<2x8xf32> to vector<1x2x8xf32>
      tpu.vector_store %arg4[%c0_52, %c0_53, %c0_54], %73 {strides = array<i32>} : memref<1x2x8xf32, #tpu.memory_space<vmem>>, vector<1x2x8xf32>,
    } else {
    }
    %c0_45 = arith.constant 0 : index
    %c0_46 = arith.constant 0 : index
    %c0_47 = arith.constant 0 : index
    %64 = vector.load %arg4[%c0_45, %c0_46, %c0_47] : memref<1x2x8xf32, #tpu.memory_space<vmem>>, vector<1x2x8xf32>
    %65 = vector.shape_cast %64 : vector<1x2x8xf32> to vector<2x8xf32>
    %66 = arith.addf %65, %60 : vector<2x8xf32>
    %c0_48 = arith.constant 0 : index
    %c0_49 = arith.constant 0 : index
    %c0_50 = arith.constant 0 : index
    %67 = vector.load %arg4[%c0_48, %c0_49, %c0_50] : memref<1x2x8xf32, #tpu.memory_space<vmem>>, vector<1x2x8xf32>
    %68 = vector.shape_cast %67 : vector<1x2x8xf32> to vector<2x8xf32>
    %69 = vector.shape_cast %66 : vector<2x8xf32> to vector<1x2x8xf32>
    tpu.vector_store %arg4[%c0_48, %c0_49, %c0_50], %69 {strides = array<i32>} : memref<1x2x8xf32, #tpu.memory_space<vmem>>, vector<1x2x8xf32>,
    return
  }
  func.func @transform_0(%arg0: i32, %arg1: i32) -> (i32, i32, i32, i32) {
    %c0_i32 = arith.constant 0 : i32
    %c0_i32_0 = arith.constant 0 : i32
    %c0_i32_1 = arith.constant 0 : i32
    %c0_i32_2 = arith.constant 0 : i32
    return %arg0, %c0_i32, %c0_i32_0, %c0_i32_1 : i32, i32, i32, i32
  }
  func.func @transform_1(%arg0: i32, %arg1: i32) -> (i32, i32, i32) {
    %c0_i32 = arith.constant 0 : i32
    %c0_i32_0 = arith.constant 0 : i32
    %c0_i32_1 = arith.constant 0 : i32
    %c0_i32_2 = arith.constant 0 : i32
    return %c0_i32, %c0_i32_0, %c0_i32_1 : i32, i32, i32
  }
  func.func @transform_2(%arg0: i32, %arg1: i32) -> (i32, i32, i32) {
    %c0_i32 = arith.constant 0 : i32
    %c0_i32_0 = arith.constant 0 : i32
    %c0_i32_1 = arith.constant 0 : i32
    return %arg0, %c0_i32, %c0_i32_0 : i32, i32, i32
  }
}

</mosaic_0001>

<llo_original>
// kernel: tpu_custom_call.1
$region0: #{tpu_custom_call.1}
  #allocation0 [shape = 'u32[]', space=smem, size = 0x4, offset = 0x4, fixed_abs, tag = 'smem constant byte address 0x4 - core index']
  #allocation1 [shape = 'u32[144,128]{1,0:T(1,128)}', space=vmem, size = 0x12000, scoped, tag = 'internal scratch']
  %s0 = inlined_call_operand.vmem [shape: bf16[2,18,18,4], index: 0, kind: input, shape index: {}]
  %s1 = inlined_call_operand.vmem [shape: bf16[3,12,8], index: 1, kind: input, shape index: {}]
  %s2 = inlined_call_operand.hbm [shape: f32[2,2,8], index: 2, kind: output, shape index: {}]
  %s3 = sld [smem:[#allocation0]]
  $region45: #{tpu_custom_call.1} parent=0
    _
  %s5 = ssub.s32 1, %s3
  %s6 = scalar_select 0, %s5, %s3
  $region1: #{tpu_custom_call.1} parent=0
    #allocation2 [shape = 'u8[2048]{0}', space=vmem, size = 0x800, scoped, tag = 'output window, operand 0']
    #allocation3 [shape = 's32[2]{0}', space=sflag, size = 0x8, scoped, tag = 'scoped memory for tpu_custom_call.1']
    %7 = vsyncpa [#allocation3], 0
    %s8 = scalar_lea.sflag [#allocation3], 1
    %9 = vsyncpa %s8, 0
    loop: start=0, step=1, limit=6
    $region2: #{tpu_custom_call.1} parent=1 // loop_pre_header
      _
    $region3: #{tpu_custom_call.1} parent=1 // loop_header
      %s11 = sphi 0, %s15
      %p12 = scmp.ge.s32.totalorder %s11, 6
      %s18 = sphi 0, %s30
      %s19 = sphi 0, %s26
      %s20 = sphi 0, %s18
      %s21 = sphi 0, %s19
      %s22 = sphi 0, %s20
      %s23 = sphi 0, %s21
      %s33 = sphi 0, %s35
      %s36 = sphi 0, %s33
      %s37 = sphi 0, %s36
      %s53 = sphi 0, %s37
      %s57 = sphi 0, %s57
      %s59 = sphi 0, %s57
      %s60 = sphi 0, %s59
      %s74 = sphi 0, %s60
      %s80 = sphi 0, %s82
      %s83 = sphi 0, %s80
      %s84 = sphi 0, %s83
      %s100 = sphi 0, %s84
    $region4: #{tpu_custom_call.1} parent=1 // loop_header_branch
      %14 = sbr.rel (%p12) target = $region8
    $region5: #{tpu_custom_call.1} parent=1 // loop_body
      %s16 = ssub.s32 %s11, 1
      %s17 = ssub.s32 %s11, 2
      %s24 = sadd.s32 1, %s19
      %p25 = scmp.ge.s32.totalorder %s24, 2
      %s26 = scalar_select %p25, 0, %s24
      %s27 = sadd.s32 1, %s18
      %s28 = scalar_select %p25, %s27, %s18
      %p29 = scmp.ge.s32.totalorder %s28, 2
      %s30 = scalar_select %p29, 0, %s28
      %s31 = ssub.s32 %s18, %s30
      %p32 = scmp.eq.s32.totalorder %s31, 0
      %s34 = sadd.s32 %s33, 1
      %s35 = scalar_select %p32, %s33, %s34
      %p38 = pneg %p32
      %p39 = scmp.eq.s32.totalorder %s11, 3
      %p40 = por %p38, %p39
      %p41 = scmp.ne.s32.totalorder %s33, %s36
      %p42 = scmp.eq.s32.totalorder %s11, 0
      %p43 = por %p41, %p42
      %p44 = scmp.ne.s32.totalorder %s33, %s36
      %p45 = scmp.eq.s32.totalorder %s16, 3
      %p46 = por %p44, %p45
      %p47 = scmp.ne.s32.totalorder %s36, %s37
      %p48 = scmp.eq.s32.totalorder %s16, 0
      %p49 = por %p47, %p48
      %p50 = scmp.ne.s32.totalorder %s36, %s37
      %p51 = scmp.eq.s32.totalorder %s17, 3
      %p52 = por %p50, %p51
      %p54 = scmp.ne.s32.totalorder %s37, %s53
      %p55 = scmp.eq.s32.totalorder %s17, 0
      %p56 = por %p54, %p55
      %s58 = sadd.s32 %s57, 1
      %p61 = scmp.eq.s32.totalorder %s11, 3
      %p62 = scmp.ne.s32.totalorder %s57, %s59
      %p63 = scmp.eq.s32.totalorder %s11, 0
      %p64 = por %p62, %p63
      %p65 = scmp.ne.s32.totalorder %s57, %s59
      %p66 = scmp.eq.s32.totalorder %s16, 3
      %p67 = por %p65, %p66
      %p68 = scmp.ne.s32.totalorder %s59, %s60
      %p69 = scmp.eq.s32.totalorder %s16, 0
      %p70 = por %p68, %p69
      %p71 = scmp.ne.s32.totalorder %s59, %s60
      %p72 = scmp.eq.s32.totalorder %s17, 3
      %p73 = por %p71, %p72
      %p75 = scmp.ne.s32.totalorder %s60, %s74
      %p76 = scmp.eq.s32.totalorder %s17, 0
      %p77 = por %p75, %p76
      %s78 = ssub.s32 %s18, %s30
      %p79 = scmp.eq.s32.totalorder %s78, 0
      %s81 = sadd.s32 %s80, 1
      %s82 = scalar_select %p79, %s80, %s81
      %p85 = pneg %p79
      %p86 = scmp.eq.s32.totalorder %s11, 3
      %p87 = por %p85, %p86
      %p88 = scmp.ne.s32.totalorder %s80, %s83
      %p89 = scmp.eq.s32.totalorder %s11, 0
      %p90 = por %p88, %p89
      %p91 = scmp.ne.s32.totalorder %s80, %s83
      %p92 = scmp.eq.s32.totalorder %s16, 3
      %p93 = por %p91, %p92
      %p94 = scmp.ne.s32.totalorder %s83, %s84
      %p95 = scmp.eq.s32.totalorder %s16, 0
      %p96 = por %p94, %p95
      %p97 = scmp.ne.s32.totalorder %s83, %s84
      %p98 = scmp.eq.s32.totalorder %s17, 3
      %p99 = por %p97, %p98
      %p101 = scmp.ne.s32.totalorder %s84, %s100
      %p102 = scmp.eq.s32.totalorder %s17, 0
      %p103 = por %p101, %p102
      %p104 = scmp.le.s32.totalorder 1, %s11
      %p105 = scmp.lt.s32.totalorder %s11, 5
      %p106 = pnand %p104, %p105
      %p107 = pneg %p106
      // Predicated region
      $region9: #{tpu_custom_call.1} parent=5 // pred_check
        _
      $region10: #{tpu_custom_call.1} parent=5 // pred_check_branch
        %109 = sbr.rel (%p106) target = $region12
      $region11: #{tpu_custom_call.1} parent=5 // pred_region
        %s110 = ssub.s32 %s11, 1
        // Predicated region
        $region13: #{tpu_custom_call.1} parent=11 // pred_check
          %p111 = pneg %p70
        $region14: #{tpu_custom_call.1} parent=11 // pred_check_branch
          %113 = sbr.rel (%p111) target = $region16
        $region15: #{tpu_custom_call.1} parent=11 // pred_region
          _
        $region16: #{tpu_custom_call.1} parent=11 // pred_fallthru
          _
      $region12: #{tpu_custom_call.1} parent=5 // pred_fallthru
        _
      %p114 = scmp.lt.s32.totalorder %s11, 4
      // Predicated region
      $region17: #{tpu_custom_call.1} parent=5 // pred_check
        %p115 = pneg %p114
      $region18: #{tpu_custom_call.1} parent=5 // pred_check_branch
        %117 = sbr.rel (%p115) target = $region20
      $region19: #{tpu_custom_call.1} parent=5 // pred_region
        // Predicated region
        $region21: #{tpu_custom_call.1} parent=19 // pred_check
          %p118 = pneg %p43
        $region22: #{tpu_custom_call.1} parent=19 // pred_check_branch
          %120 = sbr.rel (%p118) target = $region24
        $region23: #{tpu_custom_call.1} parent=19 // pred_region
          %p121 = scmp.lt.s32.totalorder %s18, 1
          %s122 = scalar_select %p121, %s18, 1
          %s123 = smul.addr %s122, 54
          %s124 = smul.addr %s123, 4
          %s125 = scalar_lea.vmem %s0, %s124
        $region24: #{tpu_custom_call.1} parent=19 // pred_fallthru
          _
      $region20: #{tpu_custom_call.1} parent=5 // pred_fallthru
        _
      %p126 = scmp.le.s32.totalorder 1, %s11
      %p127 = scmp.lt.s32.totalorder %s11, 5
      %p128 = pnand %p126, %p127
      %p129 = pneg %p128
      // Predicated region
      $region25: #{tpu_custom_call.1} parent=5 // pred_check
        _
      $region26: #{tpu_custom_call.1} parent=5 // pred_check_branch
        %131 = sbr.rel (%p128) target = $region28
      $region27: #{tpu_custom_call.1} parent=5 // pred_region
        %s132 = ssub.s32 %s11, 1
        %p133 = scmp.lt.s32.totalorder %s20, 1
        %s134 = scalar_select %p133, %s20, 1
        %s135 = smul.addr %s134, 54
        %s136 = smul.addr %s135, 4
        %s137 = scalar_lea.vmem %s0, %s136
        %p138 = pneg %p49
        %p139 = pneg %p46
        %p140 = pneg %p70
        %p141 = pneg %p67
        %p142 = pneg %p96
        %p143 = pneg %p93
        %s144 = sand.u32 %s83, 1
        %s145 = scalar_lea.sflag [#allocation3], %s144
        %s146 = sand.u32 %s83, 1
        %s147 = smul.addr %s146, 2
        %s148 = scalar_lea.vmem [#allocation2], %s147
        %p149 = scmp.lt.s32.totalorder %s20, 1
        %s150 = scalar_select %p149, %s20, 1
        %s151 = smul.addr %s150, 54
        %s152 = smul.addr %s151, 4
        %s153 = scalar_lea.vmem %s0, %s152
        %s155 = smul.u32 %s21, 8
        %s156 = smul.u32 %s155, 3
        %s157 = smul.addr %s156, 4
        %s158 = scalar_lea.vmem %s153, %s157
        %v159 = vld [vmem:[%s158] sm:$0xf]
        %v160 = vld [vmem:[%s158 + $0x4] sm:$0xf]
        %v161 = vld [vmem:[%s158 + $0xc] sm:$0xf]
        %v162 = vld [vmem:[%s158 + $0x10] sm:$0xf]
        %v163 = vld [vmem:[%s158 + $0x18] sm:$0xf]
        %v164 = vld [vmem:[%s158 + $0x1c] sm:$0xf]
        %v165 = vld [vmem:[%s158 + $0x24] sm:$0xf]
        %v166 = vld [vmem:[%s158 + $0x28] sm:$0xf]
        %v167 = vld [vmem:[%s158 + $0x30] sm:$0xf]
        %v168 = vld [vmem:[%s158 + $0x34] sm:$0xf]
        %v169 = vld [vmem:[%s158 + $0x3c] sm:$0xf]
        %v170 = vld [vmem:[%s158 + $0x40] sm:$0xf]
        %v171 = vld [vmem:[%s158 + $0x48] sm:$0xf]
        %v172 = vld [vmem:[%s158 + $0x4c] sm:$0xf]
        %v173 = vld [vmem:[%s158 + $0x54] sm:$0xf]
        %v174 = vld [vmem:[%s158 + $0x58] sm:$0xf]
        %s175 = sadd.s32 %s155, 1
        %s176 = smul.u32 %s175, 3
        %s177 = smul.addr %s176, 4
        %s178 = scalar_lea.vmem %s153, %s177
        %v179 = vld [vmem:[%s178] sm:$0xf]
        %v180 = vld [vmem:[%s178 + $0x4] sm:$0xf]
        %v181 = vld [vmem:[%s178 + $0xc] sm:$0xf]
        %v182 = vld [vmem:[%s178 + $0x10] sm:$0xf]
        %v183 = vld [vmem:[%s178 + $0x18] sm:$0xf]
        %v184 = vld [vmem:[%s178 + $0x1c] sm:$0xf]
        %v185 = vld [vmem:[%s178 + $0x24] sm:$0xf]
        %v186 = vld [vmem:[%s178 + $0x28] sm:$0xf]
        %v187 = vld [vmem:[%s178 + $0x30] sm:$0xf]
        %v188 = vld [vmem:[%s178 + $0x34] sm:$0xf]
        %v189 = vld [vmem:[%s178 + $0x3c] sm:$0xf]
        %v190 = vld [vmem:[%s178 + $0x40] sm:$0xf]
        %v191 = vld [vmem:[%s178 + $0x48] sm:$0xf]
        %v192 = vld [vmem:[%s178 + $0x4c] sm:$0xf]
        %v193 = vld [vmem:[%s178 + $0x54] sm:$0xf]
        %v194 = vld [vmem:[%s178 + $0x58] sm:$0xf]
        %s195 = sadd.s32 %s155, 2
        %s196 = smul.u32 %s195, 3
        %s197 = smul.addr %s196, 4
        %s198 = scalar_lea.vmem %s153, %s197
        %v199 = vld [vmem:[%s198] sm:$0xf]
        %v200 = vld [vmem:[%s198 + $0x4] sm:$0xf]
        %v201 = vld [vmem:[%s198 + $0xc] sm:$0xf]
        %v202 = vld [vmem:[%s198 + $0x10] sm:$0xf]
        %v203 = vld [vmem:[%s198 + $0x18] sm:$0xf]
        %v204 = vld [vmem:[%s198 + $0x1c] sm:$0xf]
        %v205 = vld [vmem:[%s198 + $0x24] sm:$0xf]
        %v206 = vld [vmem:[%s198 + $0x28] sm:$0xf]
        %v207 = vld [vmem:[%s198 + $0x30] sm:$0xf]
        %v208 = vld [vmem:[%s198 + $0x34] sm:$0xf]
        %v209 = vld [vmem:[%s198 + $0x3c] sm:$0xf]
        %v210 = vld [vmem:[%s198 + $0x40] sm:$0xf]
        %v211 = vld [vmem:[%s198 + $0x48] sm:$0xf]
        %v212 = vld [vmem:[%s198 + $0x4c] sm:$0xf]
        %v213 = vld [vmem:[%s198 + $0x54] sm:$0xf]
        %v214 = vld [vmem:[%s198 + $0x58] sm:$0xf]
        %v231 = vunpack.c.l.b16 %v159
        %v232 = vunpack.c.l.b16 %v160
        %v233 = vunpack.c.l.b16 %v161
        %v234 = vunpack.c.l.b16 %v162
        %v235 = vunpack.c.l.b16 %v163
        %v236 = vunpack.c.l.b16 %v164
        %v237 = vunpack.c.l.b16 %v165
        %v238 = vunpack.c.l.b16 %v166
        %v239 = vunpack.c.l.b16 %v167
        %v240 = vunpack.c.l.b16 %v168
        %v241 = vunpack.c.l.b16 %v169
        %v242 = vunpack.c.l.b16 %v170
        %v243 = vunpack.c.l.b16 %v171
        %v244 = vunpack.c.l.b16 %v172
        %v245 = vunpack.c.l.b16 %v173
        %v246 = vunpack.c.l.b16 %v174
        %v247 = vpack.c.b16 %v232, %v231
        %v248 = vpack.c.b16 %v234, %v233
        %v249 = vpack.c.b16 %v236, %v235
        %v250 = vpack.c.b16 %v238, %v237
        %v251 = vpack.c.b16 %v240, %v239
        %v252 = vpack.c.b16 %v242, %v241
        %v253 = vpack.c.b16 %v244, %v243
        %v254 = vpack.c.b16 %v246, %v245
        %v271 = vunpack.c.l.b16 %v179
        %v272 = vunpack.c.l.b16 %v180
        %v273 = vunpack.c.l.b16 %v181
        %v274 = vunpack.c.l.b16 %v182
        %v275 = vunpack.c.l.b16 %v183
        %v276 = vunpack.c.l.b16 %v184
        %v277 = vunpack.c.l.b16 %v185
        %v278 = vunpack.c.l.b16 %v186
        %v279 = vunpack.c.l.b16 %v187
        %v280 = vunpack.c.l.b16 %v188
        %v281 = vunpack.c.l.b16 %v189
        %v282 = vunpack.c.l.b16 %v190
        %v283 = vunpack.c.l.b16 %v191
        %v284 = vunpack.c.l.b16 %v192
        %v285 = vunpack.c.l.b16 %v193
        %v286 = vunpack.c.l.b16 %v194
        %v287 = vpack.c.b16 %v272, %v271
        %v288 = vpack.c.b16 %v274, %v273
        %v289 = vpack.c.b16 %v276, %v275
        %v290 = vpack.c.b16 %v278, %v277
        %v291 = vpack.c.b16 %v280, %v279
        %v292 = vpack.c.b16 %v282, %v281
        %v293 = vpack.c.b16 %v284, %v283
        %v294 = vpack.c.b16 %v286, %v285
        %295 = vrot.lane.b32.xlu0 %v287, 4
        %v296 = vpop.permute.xlu0 %295
        %297 = vrot.lane.b32.xlu0 %v288, 4
        %v298 = vpop.permute.xlu0 %297
        %299 = vrot.lane.b32.xlu0 %v289, 4
        %v300 = vpop.permute.xlu0 %299
        %301 = vrot.lane.b32.xlu0 %v290, 4
        %v302 = vpop.permute.xlu0 %301
        %303 = vrot.lane.b32.xlu0 %v291, 4
        %v304 = vpop.permute.xlu0 %303
        %305 = vrot.lane.b32.xlu0 %v292, 4
        %v306 = vpop.permute.xlu0 %305
        %307 = vrot.lane.b32.xlu0 %v293, 4
        %v308 = vpop.permute.xlu0 %307
        %309 = vrot.lane.b32.xlu0 %v294, 4
        %v310 = vpop.permute.xlu0 %309
        %v327 = vunpack.c.l.b16 %v199
        %v328 = vunpack.c.l.b16 %v200
        %v329 = vunpack.c.l.b16 %v201
        %v330 = vunpack.c.l.b16 %v202
        %v331 = vunpack.c.l.b16 %v203
        %v332 = vunpack.c.l.b16 %v204
        %v333 = vunpack.c.l.b16 %v205
        %v334 = vunpack.c.l.b16 %v206
        %v335 = vunpack.c.l.b16 %v207
        %v336 = vunpack.c.l.b16 %v208
        %v337 = vunpack.c.l.b16 %v209
        %v338 = vunpack.c.l.b16 %v210
        %v339 = vunpack.c.l.b16 %v211
        %v340 = vunpack.c.l.b16 %v212
        %v341 = vunpack.c.l.b16 %v213
        %v342 = vunpack.c.l.b16 %v214
        %v343 = vpack.c.b16 %v328, %v327
        %v344 = vpack.c.b16 %v330, %v329
        %v345 = vpack.c.b16 %v332, %v331
        %v346 = vpack.c.b16 %v334, %v333
        %v347 = vpack.c.b16 %v336, %v335
        %v348 = vpack.c.b16 %v338, %v337
        %v349 = vpack.c.b16 %v340, %v339
        %v350 = vpack.c.b16 %v342, %v341
        %351 = vrot.lane.b32.xlu0 %v343, 8
        %v352 = vpop.permute.xlu0 %351
        %353 = vrot.lane.b32.xlu0 %v344, 8
        %v354 = vpop.permute.xlu0 %353
        %355 = vrot.lane.b32.xlu0 %v345, 8
        %v356 = vpop.permute.xlu0 %355
        %357 = vrot.lane.b32.xlu0 %v346, 8
        %v358 = vpop.permute.xlu0 %357
        %359 = vrot.lane.b32.xlu0 %v347, 8
        %v360 = vpop.permute.xlu0 %359
        %361 = vrot.lane.b32.xlu0 %v348, 8
        %v362 = vpop.permute.xlu0 %361
        %363 = vrot.lane.b32.xlu0 %v349, 8
        %v364 = vpop.permute.xlu0 %363
        %365 = vrot.lane.b32.xlu0 %v350, 8
        %v366 = vpop.permute.xlu0 %365
        %vm367 = vcmask 31744
        %v370 = vsel %vm367, %v247, %v296
        %v373 = vsel %vm367, %v248, %v298
        %v376 = vsel %vm367, %v249, %v300
        %v379 = vsel %vm367, %v250, %v302
        %v382 = vsel %vm367, %v251, %v304
        %v385 = vsel %vm367, %v252, %v306
        %v388 = vsel %vm367, %v253, %v308
        %v391 = vsel %vm367, %v254, %v310
        %vm392 = vcmask 64512
        %v394 = vsel %vm392, %v370, %v352
        %v396 = vsel %vm392, %v373, %v354
        %v398 = vsel %vm392, %v376, %v356
        %v400 = vsel %vm392, %v379, %v358
        %v402 = vsel %vm392, %v382, %v360
        %v404 = vsel %vm392, %v385, %v362
        %v406 = vsel %vm392, %v388, %v364
        %v408 = vsel %vm392, %v391, %v366
        %v409 = vld [vmem:[%s1] sm:$0xf]
        %v410 = vld [vmem:[%s1 + $0x4] sm:$0x3]
        %v411 = vld [vmem:[%s158 + $0x8] sm:$0x1]
        %v412 = vld [vmem:[%s158 + $0x14] sm:$0x1]
        %v413 = vld [vmem:[%s158 + $0x20] sm:$0x1]
        %v414 = vld [vmem:[%s158 + $0x2c] sm:$0x1]
        %v415 = vld [vmem:[%s158 + $0x38] sm:$0x1]
        %v416 = vld [vmem:[%s158 + $0x44] sm:$0x1]
        %v417 = vld [vmem:[%s158 + $0x50] sm:$0x1]
        %v418 = vld [vmem:[%s158 + $0x5c] sm:$0x1]
        %v419 = vld [vmem:[%s178 + $0x8] sm:$0x1]
        %v420 = vld [vmem:[%s178 + $0x14] sm:$0x1]
        %v421 = vld [vmem:[%s178 + $0x20] sm:$0x1]
        %v422 = vld [vmem:[%s178 + $0x2c] sm:$0x1]
        %v423 = vld [vmem:[%s178 + $0x38] sm:$0x1]
        %v424 = vld [vmem:[%s178 + $0x44] sm:$0x1]
        %v425 = vld [vmem:[%s178 + $0x50] sm:$0x1]
        %v426 = vld [vmem:[%s178 + $0x5c] sm:$0x1]
        %v427 = vld [vmem:[%s198 + $0x8] sm:$0x1]
        %v428 = vld [vmem:[%s198 + $0x14] sm:$0x1]
        %v429 = vld [vmem:[%s198 + $0x20] sm:$0x1]
        %v430 = vld [vmem:[%s198 + $0x2c] sm:$0x1]
        %v431 = vld [vmem:[%s198 + $0x38] sm:$0x1]
        %v432 = vld [vmem:[%s198 + $0x44] sm:$0x1]
        %v433 = vld [vmem:[%s198 + $0x50] sm:$0x1]
        %v434 = vld [vmem:[%s198 + $0x5c] sm:$0x1]
        %v443 = vunpack.c.l.b16 %v411
        %v444 = vunpack.c.l.b16 %v412
        %v445 = vunpack.c.l.b16 %v413
        %v446 = vunpack.c.l.b16 %v414
        %v447 = vunpack.c.l.b16 %v415
        %v448 = vunpack.c.l.b16 %v416
        %v449 = vunpack.c.l.b16 %v417
        %v450 = vunpack.c.l.b16 %v418
        %v451 = vpack.c.b16 %v443, %v443
        %v452 = vpack.c.b16 %v444, %v444
        %v453 = vpack.c.b16 %v445, %v445
        %v454 = vpack.c.b16 %v446, %v446
        %v455 = vpack.c.b16 %v447, %v447
        %v456 = vpack.c.b16 %v448, %v448
        %v457 = vpack.c.b16 %v449, %v449
        %v458 = vpack.c.b16 %v450, %v450
        %v467 = vunpack.c.l.b16 %v419
        %v468 = vunpack.c.l.b16 %v420
        %v469 = vunpack.c.l.b16 %v421
        %v470 = vunpack.c.l.b16 %v422
        %v471 = vunpack.c.l.b16 %v423
        %v472 = vunpack.c.l.b16 %v424
        %v473 = vunpack.c.l.b16 %v425
        %v474 = vunpack.c.l.b16 %v426
        %v475 = vpack.c.b16 %v467, %v467
        %v476 = vpack.c.b16 %v468, %v468
        %v477 = vpack.c.b16 %v469, %v469
        %v478 = vpack.c.b16 %v470, %v470
        %v479 = vpack.c.b16 %v471, %v471
        %v480 = vpack.c.b16 %v472, %v472
        %v481 = vpack.c.b16 %v473, %v473
        %v482 = vpack.c.b16 %v474, %v474
        %483 = vrot.lane.b32.xlu0 %v475, 4
        %v484 = vpop.permute.xlu0 %483
        %485 = vrot.lane.b32.xlu0 %v476, 4
        %v486 = vpop.permute.xlu0 %485
        %487 = vrot.lane.b32.xlu0 %v477, 4
        %v488 = vpop.permute.xlu0 %487
        %489 = vrot.lane.b32.xlu0 %v478, 4
        %v490 = vpop.permute.xlu0 %489
        %491 = vrot.lane.b32.xlu0 %v479, 4
        %v492 = vpop.permute.xlu0 %491
        %493 = vrot.lane.b32.xlu0 %v480, 4
        %v494 = vpop.permute.xlu0 %493
        %495 = vrot.lane.b32.xlu0 %v481, 4
        %v496 = vpop.permute.xlu0 %495
        %497 = vrot.lane.b32.xlu0 %v482, 4
        %v498 = vpop.permute.xlu0 %497
        %v507 = vunpack.c.l.b16 %v427
        %v508 = vunpack.c.l.b16 %v428
        %v509 = vunpack.c.l.b16 %v429
        %v510 = vunpack.c.l.b16 %v430
        %v511 = vunpack.c.l.b16 %v431
        %v512 = vunpack.c.l.b16 %v432
        %v513 = vunpack.c.l.b16 %v433
        %v514 = vunpack.c.l.b16 %v434
        %v515 = vpack.c.b16 %v507, %v507
        %v516 = vpack.c.b16 %v508, %v508
        %v517 = vpack.c.b16 %v509, %v509
        %v518 = vpack.c.b16 %v510, %v510
        %v519 = vpack.c.b16 %v511, %v511
        %v520 = vpack.c.b16 %v512, %v512
        %v521 = vpack.c.b16 %v513, %v513
        %v522 = vpack.c.b16 %v514, %v514
        %523 = vrot.lane.b32.xlu0 %v515, 8
        %v524 = vpop.permute.xlu0 %523
        %525 = vrot.lane.b32.xlu0 %v516, 8
        %v526 = vpop.permute.xlu0 %525
        %527 = vrot.lane.b32.xlu0 %v517, 8
        %v528 = vpop.permute.xlu0 %527
        %529 = vrot.lane.b32.xlu0 %v518, 8
        %v530 = vpop.permute.xlu0 %529
        %531 = vrot.lane.b32.xlu0 %v519, 8
        %v532 = vpop.permute.xlu0 %531
        %533 = vrot.lane.b32.xlu0 %v520, 8
        %v534 = vpop.permute.xlu0 %533
        %535 = vrot.lane.b32.xlu0 %v521, 8
        %v536 = vpop.permute.xlu0 %535
        %537 = vrot.lane.b32.xlu0 %v522, 8
        %v538 = vpop.permute.xlu0 %537
        %v541 = vsel %vm367, %v451, %v484
        %v544 = vsel %vm367, %v452, %v486
        %v547 = vsel %vm367, %v453, %v488
        %v550 = vsel %vm367, %v454, %v490
        %v553 = vsel %vm367, %v455, %v492
        %v556 = vsel %vm367, %v456, %v494
        %v559 = vsel %vm367, %v457, %v496
        %v562 = vsel %vm367, %v458, %v498
        %v564 = vsel %vm392, %v541, %v524
        %v566 = vsel %vm392, %v544, %v526
        %v568 = vsel %vm392, %v547, %v528
        %v570 = vsel %vm392, %v550, %v530
        %v572 = vsel %vm392, %v553, %v532
        %v574 = vsel %vm392, %v556, %v534
        %v576 = vsel %vm392, %v559, %v536
        %v578 = vsel %vm392, %v562, %v538
        %vm579 = vsmask.f32 7424
        %v580 = vshrl.u32 %v394, 16
        %v582 = vshll.u32 %v394, 16
        %v584 = vrot.slane %v582, 1
        %v585 = vor.u32 %v580, %v584
        %v586 = vshll.u32 %v564, 16
        %v588 = vrot.slane %v586, 1
        %v589 = vsel %vm579, %v585, %v588
        %v590 = vshrl.u32 %v396, 16
        %v592 = vshll.u32 %v396, 16
        %v594 = vrot.slane %v592, 1
        %v595 = vor.u32 %v590, %v594
        %v596 = vshll.u32 %v566, 16
        %v598 = vrot.slane %v596, 1
        %v599 = vsel %vm579, %v595, %v598
        %v600 = vshrl.u32 %v398, 16
        %v602 = vshll.u32 %v398, 16
        %v604 = vrot.slane %v602, 1
        %v605 = vor.u32 %v600, %v604
        %v606 = vshll.u32 %v568, 16
        %v608 = vrot.slane %v606, 1
        %v609 = vsel %vm579, %v605, %v608
        %v610 = vshrl.u32 %v400, 16
        %v612 = vshll.u32 %v400, 16
        %v614 = vrot.slane %v612, 1
        %v615 = vor.u32 %v610, %v614
        %v616 = vshll.u32 %v570, 16
        %v618 = vrot.slane %v616, 1
        %v619 = vsel %vm579, %v615, %v618
        %v620 = vshrl.u32 %v402, 16
        %v622 = vshll.u32 %v402, 16
        %v624 = vrot.slane %v622, 1
        %v625 = vor.u32 %v620, %v624
        %v626 = vshll.u32 %v572, 16
        %v628 = vrot.slane %v626, 1
        %v629 = vsel %vm579, %v625, %v628
        %v630 = vshrl.u32 %v404, 16
        %v632 = vshll.u32 %v404, 16
        %v634 = vrot.slane %v632, 1
        %v635 = vor.u32 %v630, %v634
        %v636 = vshll.u32 %v574, 16
        %v638 = vrot.slane %v636, 1
        %v639 = vsel %vm579, %v635, %v638
        %v640 = vshrl.u32 %v406, 16
        %v642 = vshll.u32 %v406, 16
        %v644 = vrot.slane %v642, 1
        %v645 = vor.u32 %v640, %v644
        %v646 = vshll.u32 %v576, 16
        %v648 = vrot.slane %v646, 1
        %v649 = vsel %vm579, %v645, %v648
        %v650 = vshrl.u32 %v408, 16
        %v652 = vshll.u32 %v408, 16
        %v654 = vrot.slane %v652, 1
        %v655 = vor.u32 %v650, %v654
        %v656 = vshll.u32 %v578, 16
        %v658 = vrot.slane %v656, 1
        %v659 = vsel %vm579, %v655, %v658
        %s660 = scalar_lea.vmem %s1, 8
        %v661 = vld [vmem:[%s660] sm:$0xf]
        %v662 = vld [vmem:[%s660 + $0x4] sm:$0x3]
        %v665 = vunpack.c.l.b16 %v661
        %v666 = vunpack.c.l.b16 %v662
        %v667 = vpack.c.b16 %v666, %v665
        %vm668 = vcmask 97280
        %v670 = vsel %vm668, %v589, 0
        %v673 = vsel %vm668, %v599, 0
        %v676 = vsel %vm668, %v609, 0
        %v679 = vsel %vm668, %v619, 0
        %v682 = vsel %vm668, %v629, 0
        %v685 = vsel %vm668, %v639, 0
        %v688 = vsel %vm668, %v649, 0
        %v691 = vsel %vm668, %v659, 0
        %vm693 = vcmask 1045504
        %v695 = vsel %vm693, %v667, 0
        %697 = vmatprep.subr.bf16.mxu0 0
        %698 = vmatpush1.bf16.msra.mxu0 %v695
        %699 = vmatprep.subr.bf16.mxu0 0
        %700 = vmatpush1.bf16.msra.mxu0 0
        %701 = vmatprep.subr.bf16.mxu0 0
        %702 = vmatpush1.bf16.msra.mxu0 0
        %703 = vmatprep.subr.bf16.mxu0 0
        %704 = vmatpush1.bf16.msra.mxu0 0
        %705 = vmatprep.subr.bf16.mxu0 0
        %706 = vmatpush1.bf16.msra.mxu0 0
        %707 = vmatprep.subr.bf16.mxu0 0
        %708 = vmatpush1.bf16.msra.mxu0 0
        %709 = vmatprep.subr.bf16.mxu0 0
        %710 = vmatpush1.bf16.msra.mxu0 0
        %711 = vmatprep.subr.bf16.mxu0 0
        %712 = vmatpush1.bf16.msra.mxu0 0
        %713 = vmatprep.subr.bf16.mxu0 0
        %714 = vmatpush1.bf16.msra.mxu0 0
        %715 = vmatprep.subr.bf16.mxu0 0
        %716 = vmatpush1.bf16.msra.mxu0 0
        %717 = vmatprep.subr.bf16.mxu0 0
        %718 = vmatpush1.bf16.msra.mxu0 0
        %719 = vmatprep.subr.bf16.mxu0 0
        %720 = vmatpush1.bf16.msra.mxu0 0
        %721 = vmatprep.subr.bf16.mxu0 0
        %722 = vmatpush1.bf16.msra.mxu0 0
        %723 = vmatprep.subr.bf16.mxu0 0
        %724 = vmatpush1.bf16.msra.mxu0 0
        %725 = vmatprep.subr.bf16.mxu0 0
        %726 = vmatpush1.bf16.msra.mxu0 0
        %727 = vmatprep.subr.bf16.mxu0 0
        %728 = vmatpush1.bf16.msra.mxu0 0
        %729 = vmatprep.mubr.bf16.mxu0 0
        %730 = vmatmul.mubr.bf16.gmra.mrb[0].mxu0 %v670
        %v731 = vpop.f32.mrb[0].mxu0
        %v732 = vadd.f32 0.0, %v731
        %v733 = vpop.f32.mrb[0].mxu0
        %v734 = vpop.f32.mrb[0].mxu0
        %v735 = vadd.f32 0.0, %v734
        %v736 = vpop.f32.mrb[0].mxu0
        %737 = vmatprep.mubr.bf16.mxu0 0
        %738 = vmatmul.mubr.bf16.gmra.mrb[0].mxu0 %v673
        %v739 = vpop.f32.mrb[0].mxu0
        %v740 = vadd.f32 0.0, %v739
        %v741 = vpop.f32.mrb[0].mxu0
        %v742 = vpop.f32.mrb[0].mxu0
        %v743 = vadd.f32 0.0, %v742
        %v744 = vpop.f32.mrb[0].mxu0
        %745 = vmatprep.mubr.bf16.mxu0 0
        %746 = vmatmul.mubr.bf16.gmra.mrb[0].mxu0 %v676
        %v747 = vpop.f32.mrb[0].mxu0
        %v748 = vadd.f32 0.0, %v747
        %v749 = vpop.f32.mrb[0].mxu0
        %v750 = vpop.f32.mrb[0].mxu0
        %v751 = vadd.f32 0.0, %v750
        %v752 = vpop.f32.mrb[0].mxu0
        %753 = vmatprep.mubr.bf16.mxu0 0
        %754 = vmatmul.mubr.bf16.gmra.mrb[0].mxu0 %v679
        %v755 = vpop.f32.mrb[0].mxu0
        %v756 = vadd.f32 0.0, %v755
        %v757 = vpop.f32.mrb[0].mxu0
        %v758 = vpop.f32.mrb[0].mxu0
        %v759 = vadd.f32 0.0, %v758
        %v760 = vpop.f32.mrb[0].mxu0
        %761 = vmatprep.mubr.bf16.mxu0 0
        %762 = vmatmul.mubr.bf16.gmra.mrb[0].mxu0 %v682
        %v763 = vpop.f32.mrb[0].mxu0
        %v764 = vadd.f32 0.0, %v763
        %v765 = vpop.f32.mrb[0].mxu0
        %v766 = vpop.f32.mrb[0].mxu0
        %v767 = vadd.f32 0.0, %v766
        %v768 = vpop.f32.mrb[0].mxu0
        %769 = vmatprep.mubr.bf16.mxu0 0
        %770 = vmatmul.mubr.bf16.gmra.mrb[0].mxu0 %v685
        %v771 = vpop.f32.mrb[0].mxu0
        %v772 = vadd.f32 0.0, %v771
        %v773 = vpop.f32.mrb[0].mxu0
        %v774 = vpop.f32.mrb[0].mxu0
        %v775 = vadd.f32 0.0, %v774
        %v776 = vpop.f32.mrb[0].mxu0
        %777 = vmatprep.mubr.bf16.mxu0 0
        %778 = vmatmul.mubr.bf16.gmra.mrb[0].mxu0 %v688
        %v779 = vpop.f32.mrb[0].mxu0
        %v780 = vadd.f32 0.0, %v779
        %v781 = vpop.f32.mrb[0].mxu0
        %v782 = vpop.f32.mrb[0].mxu0
        %v783 = vadd.f32 0.0, %v782
        %v784 = vpop.f32.mrb[0].mxu0
        %785 = vmatprep.mubr.bf16.mxu0 0
        %786 = vmatmul.mubr.bf16.gmra.mrb[0].mxu0 %v691
        %v787 = vpop.f32.mrb[0].mxu0
        %v788 = vadd.f32 0.0, %v787
        %v789 = vpop.f32.mrb[0].mxu0
        %v790 = vpop.f32.mrb[0].mxu0
        %v791 = vadd.f32 0.0, %v790
        %v792 = vpop.f32.mrb[0].mxu0
        %793 = vdwg.mxu0
        %v796 = vunpack.c.l.b16 %v409
        %v797 = vunpack.c.l.b16 %v410
        %v798 = vpack.c.b16 %v797, %v796
        %v799 = vsel %vm668, %v394, 0
        %v801 = vsel %vm668, %v396, 0
        %v803 = vsel %vm668, %v398, 0
        %v805 = vsel %vm668, %v400, 0
        %v807 = vsel %vm668, %v402, 0
        %v809 = vsel %vm668, %v404, 0
        %v811 = vsel %vm668, %v406, 0
        %v813 = vsel %vm668, %v408, 0
        %v816 = vsel %vm693, %v798, 0
        %818 = vmatprep.subr.bf16.mxu0 0
        %819 = vmatpush1.bf16.msra.mxu0 %v816
        %820 = vmatprep.subr.bf16.mxu0 0
        %821 = vmatpush1.bf16.msra.mxu0 0
        %822 = vmatprep.subr.bf16.mxu0 0
        %823 = vmatpush1.bf16.msra.mxu0 0
        %824 = vmatprep.subr.bf16.mxu0 0
        %825 = vmatpush1.bf16.msra.mxu0 0
        %826 = vmatprep.subr.bf16.mxu0 0
        %827 = vmatpush1.bf16.msra.mxu0 0
        %828 = vmatprep.subr.bf16.mxu0 0
        %829 = vmatpush1.bf16.msra.mxu0 0
        %830 = vmatprep.subr.bf16.mxu0 0
        %831 = vmatpush1.bf16.msra.mxu0 0
        %832 = vmatprep.subr.bf16.mxu0 0
        %833 = vmatpush1.bf16.msra.mxu0 0
        %834 = vmatprep.subr.bf16.mxu0 0
        %835 = vmatpush1.bf16.msra.mxu0 0
        %836 = vmatprep.subr.bf16.mxu0 0
        %837 = vmatpush1.bf16.msra.mxu0 0
        %838 = vmatprep.subr.bf16.mxu0 0
        %839 = vmatpush1.bf16.msra.mxu0 0
        %840 = vmatprep.subr.bf16.mxu0 0
        %841 = vmatpush1.bf16.msra.mxu0 0
        %842 = vmatprep.subr.bf16.mxu0 0
        %843 = vmatpush1.bf16.msra.mxu0 0
        %844 = vmatprep.subr.bf16.mxu0 0
        %845 = vmatpush1.bf16.msra.mxu0 0
        %846 = vmatprep.subr.bf16.mxu0 0
        %847 = vmatpush1.bf16.msra.mxu0 0
        %848 = vmatprep.subr.bf16.mxu0 0
        %849 = vmatpush1.bf16.msra.mxu0 0
        %850 = vmatprep.mubr.bf16.mxu0 0
        %851 = vmatmul.mubr.bf16.gmra.mrb[0].mxu0 %v799
        %v852 = vpop.f32.mrb[0].mxu0
        %v853 = vadd.f32 %v732, %v852
        %v854 = vpop.f32.mrb[0].mxu0
        %v855 = vpop.f32.mrb[0].mxu0
        %v856 = vadd.f32 %v735, %v855
        %v857 = vpop.f32.mrb[0].mxu0
        %858 = vmatprep.mubr.bf16.mxu0 0
        %859 = vmatmul.mubr.bf16.gmra.mrb[0].mxu0 %v801
        %v860 = vpop.f32.mrb[0].mxu0
        %v861 = vadd.f32 %v740, %v860
        %v862 = vpop.f32.mrb[0].mxu0
        %v863 = vpop.f32.mrb[0].mxu0
        %v864 = vadd.f32 %v743, %v863
        %v865 = vpop.f32.mrb[0].mxu0
        %866 = vmatprep.mubr.bf16.mxu0 0
        %867 = vmatmul.mubr.bf16.gmra.mrb[0].mxu0 %v803
        %v868 = vpop.f32.mrb[0].mxu0
        %v869 = vadd.f32 %v748, %v868
        %v870 = vpop.f32.mrb[0].mxu0
        %v871 = vpop.f32.mrb[0].mxu0
        %v872 = vadd.f32 %v751, %v871
        %v873 = vpop.f32.mrb[0].mxu0
        %874 = vmatprep.mubr.bf16.mxu0 0
        %875 = vmatmul.mubr.bf16.gmra.mrb[0].mxu0 %v805
        %v876 = vpop.f32.mrb[0].mxu0
        %v877 = vadd.f32 %v756, %v876
        %v878 = vpop.f32.mrb[0].mxu0
        %v879 = vpop.f32.mrb[0].mxu0
        %v880 = vadd.f32 %v759, %v879
        %v881 = vpop.f32.mrb[0].mxu0
        %882 = vmatprep.mubr.bf16.mxu0 0
        %883 = vmatmul.mubr.bf16.gmra.mrb[0].mxu0 %v807
        %v884 = vpop.f32.mrb[0].mxu0
        %v885 = vadd.f32 %v764, %v884
        %v886 = vpop.f32.mrb[0].mxu0
        %v887 = vpop.f32.mrb[0].mxu0
        %v888 = vadd.f32 %v767, %v887
        %v889 = vpop.f32.mrb[0].mxu0
        %890 = vmatprep.mubr.bf16.mxu0 0
        %891 = vmatmul.mubr.bf16.gmra.mrb[0].mxu0 %v809
        %v892 = vpop.f32.mrb[0].mxu0
        %v893 = vadd.f32 %v772, %v892
        %v894 = vpop.f32.mrb[0].mxu0
        %v895 = vpop.f32.mrb[0].mxu0
        %v896 = vadd.f32 %v775, %v895
        %v897 = vpop.f32.mrb[0].mxu0
        %898 = vmatprep.mubr.bf16.mxu0 0
        %899 = vmatmul.mubr.bf16.gmra.mrb[0].mxu0 %v811
        %v900 = vpop.f32.mrb[0].mxu0
        %v901 = vadd.f32 %v780, %v900
        %v902 = vpop.f32.mrb[0].mxu0
        %v903 = vpop.f32.mrb[0].mxu0
        %v904 = vadd.f32 %v783, %v903
        %v905 = vpop.f32.mrb[0].mxu0
        %906 = vmatprep.mubr.bf16.mxu0 0
        %907 = vmatmul.mubr.bf16.gmra.mrb[0].mxu0 %v813
        %v908 = vpop.f32.mrb[0].mxu0
        %v909 = vadd.f32 %v788, %v908
        %v910 = vpop.f32.mrb[0].mxu0
        %v911 = vpop.f32.mrb[0].mxu0
        %v912 = vadd.f32 %v791, %v911
        %v913 = vpop.f32.mrb[0].mxu0
        %914 = vdwg.mxu0
        %v915 = vld [vmem:[%s158] sm:$0xe]
        %v916 = vld [vmem:[%s158 + $0xc] sm:$0xe]
        %v917 = vld [vmem:[%s158 + $0x18] sm:$0xe]
        %v918 = vld [vmem:[%s158 + $0x24] sm:$0xe]
        %v919 = vld [vmem:[%s158 + $0x30] sm:$0xe]
        %v920 = vld [vmem:[%s158 + $0x3c] sm:$0xe]
        %v921 = vld [vmem:[%s158 + $0x48] sm:$0xe]
        %v922 = vld [vmem:[%s158 + $0x54] sm:$0xe]
        %v923 = vld [vmem:[%s178] sm:$0xe]
        %v924 = vld [vmem:[%s178 + $0xc] sm:$0xe]
        %v925 = vld [vmem:[%s178 + $0x18] sm:$0xe]
        %v926 = vld [vmem:[%s178 + $0x24] sm:$0xe]
        %v927 = vld [vmem:[%s178 + $0x30] sm:$0xe]
        %v928 = vld [vmem:[%s178 + $0x3c] sm:$0xe]
        %v929 = vld [vmem:[%s178 + $0x48] sm:$0xe]
        %v930 = vld [vmem:[%s178 + $0x54] sm:$0xe]
        %v931 = vld [vmem:[%s198] sm:$0xe]
        %v932 = vld [vmem:[%s198 + $0xc] sm:$0xe]
        %v933 = vld [vmem:[%s198 + $0x18] sm:$0xe]
        %v934 = vld [vmem:[%s198 + $0x24] sm:$0xe]
        %v935 = vld [vmem:[%s198 + $0x30] sm:$0xe]
        %v936 = vld [vmem:[%s198 + $0x3c] sm:$0xe]
        %v937 = vld [vmem:[%s198 + $0x48] sm:$0xe]
        %v938 = vld [vmem:[%s198 + $0x54] sm:$0xe]
        %v947 = vunpack.c.l.b16 %v915
        %v948 = vunpack.c.l.b16 %v916
        %v949 = vunpack.c.l.b16 %v917
        %v950 = vunpack.c.l.b16 %v918
        %v951 = vunpack.c.l.b16 %v919
        %v952 = vunpack.c.l.b16 %v920
        %v953 = vunpack.c.l.b16 %v921
        %v954 = vunpack.c.l.b16 %v922
        %v955 = vpack.c.b16 %v232, %v947
        %v956 = vpack.c.b16 %v234, %v948
        %v957 = vpack.c.b16 %v236, %v949
        %v958 = vpack.c.b16 %v238, %v950
        %v959 = vpack.c.b16 %v240, %v951
        %v960 = vpack.c.b16 %v242, %v952
        %v961 = vpack.c.b16 %v244, %v953
        %v962 = vpack.c.b16 %v246, %v954
        %v971 = vunpack.c.l.b16 %v923
        %v972 = vunpack.c.l.b16 %v924
        %v973 = vunpack.c.l.b16 %v925
        %v974 = vunpack.c.l.b16 %v926
        %v975 = vunpack.c.l.b16 %v927
        %v976 = vunpack.c.l.b16 %v928
        %v977 = vunpack.c.l.b16 %v929
        %v978 = vunpack.c.l.b16 %v930
        %v979 = vpack.c.b16 %v272, %v971
        %v980 = vpack.c.b16 %v274, %v972
        %v981 = vpack.c.b16 %v276, %v973
        %v982 = vpack.c.b16 %v278, %v974
        %v983 = vpack.c.b16 %v280, %v975
        %v984 = vpack.c.b16 %v282, %v976
        %v985 = vpack.c.b16 %v284, %v977
        %v986 = vpack.c.b16 %v286, %v978
        %987 = vrot.lane.b32.xlu0 %v979, 4
        %v988 = vpop.permute.xlu0 %987
        %989 = vrot.lane.b32.xlu0 %v980, 4
        %v990 = vpop.permute.xlu0 %989
        %991 = vrot.lane.b32.xlu0 %v981, 4
        %v992 = vpop.permute.xlu0 %991
        %993 = vrot.lane.b32.xlu0 %v982, 4
        %v994 = vpop.permute.xlu0 %993
        %995 = vrot.lane.b32.xlu0 %v983, 4
        %v996 = vpop.permute.xlu0 %995
        %997 = vrot.lane.b32.xlu0 %v984, 4
        %v998 = vpop.permute.xlu0 %997
        %999 = vrot.lane.b32.xlu0 %v985, 4
        %v1000 = vpop.permute.xlu0 %999
        %1001 = vrot.lane.b32.xlu0 %v986, 4
        %v1002 = vpop.permute.xlu0 %1001
        %v1011 = vunpack.c.l.b16 %v931
        %v1012 = vunpack.c.l.b16 %v932
        %v1013 = vunpack.c.l.b16 %v933
        %v1014 = vunpack.c.l.b16 %v934
        %v1015 = vunpack.c.l.b16 %v935
        %v1016 = vunpack.c.l.b16 %v936
        %v1017 = vunpack.c.l.b16 %v937
        %v1018 = vunpack.c.l.b16 %v938
        %v1019 = vpack.c.b16 %v328, %v1011
        %v1020 = vpack.c.b16 %v330, %v1012
        %v1021 = vpack.c.b16 %v332, %v1013
        %v1022 = vpack.c.b16 %v334, %v1014
        %v1023 = vpack.c.b16 %v336, %v1015
        %v1024 = vpack.c.b16 %v338, %v1016
        %v1025 = vpack.c.b16 %v340, %v1017
        %v1026 = vpack.c.b16 %v342, %v1018
        %1027 = vrot.lane.b32.xlu0 %v1019, 8
        %v1028 = vpop.permute.xlu0 %1027
        %1029 = vrot.lane.b32.xlu0 %v1020, 8
        %v1030 = vpop.permute.xlu0 %1029
        %1031 = vrot.lane.b32.xlu0 %v1021, 8
        %v1032 = vpop.permute.xlu0 %1031
        %1033 = vrot.lane.b32.xlu0 %v1022, 8
        %v1034 = vpop.permute.xlu0 %1033
        %1035 = vrot.lane.b32.xlu0 %v1023, 8
        %v1036 = vpop.permute.xlu0 %1035
        %1037 = vrot.lane.b32.xlu0 %v1024, 8
        %v1038 = vpop.permute.xlu0 %1037
        %1039 = vrot.lane.b32.xlu0 %v1025, 8
        %v1040 = vpop.permute.xlu0 %1039
        %1041 = vrot.lane.b32.xlu0 %v1026, 8
        %v1042 = vpop.permute.xlu0 %1041
        %v1045 = vsel %vm367, %v955, %v988
        %v1048 = vsel %vm367, %v956, %v990
        %v1051 = vsel %vm367, %v957, %v992
        %v1054 = vsel %vm367, %v958, %v994
        %v1057 = vsel %vm367, %v959, %v996
        %v1060 = vsel %vm367, %v960, %v998
        %v1063 = vsel %vm367, %v961, %v1000
        %v1066 = vsel %vm367, %v962, %v1002
        %v1068 = vsel %vm392, %v1045, %v1028
        %v1070 = vsel %vm392, %v1048, %v1030
        %v1072 = vsel %vm392, %v1051, %v1032
        %v1074 = vsel %vm392, %v1054, %v1034
        %v1076 = vsel %vm392, %v1057, %v1036
        %v1078 = vsel %vm392, %v1060, %v1038
        %v1080 = vsel %vm392, %v1063, %v1040
        %v1082 = vsel %vm392, %v1066, %v1042
        %vm1099 = vcmask 1046528
        %v1100 = vrot.slane %v1068, 1
        %v1101 = vrot.slane %v564, 1
        %v1102 = vsel %vm1099, %v1100, %v1101
        %v1103 = vrot.slane %v1070, 1
        %v1104 = vrot.slane %v566, 1
        %v1105 = vsel %vm1099, %v1103, %v1104
        %v1106 = vrot.slane %v1072, 1
        %v1107 = vrot.slane %v568, 1
        %v1108 = vsel %vm1099, %v1106, %v1107
        %v1109 = vrot.slane %v1074, 1
        %v1110 = vrot.slane %v570, 1
        %v1111 = vsel %vm1099, %v1109, %v1110
        %v1112 = vrot.slane %v1076, 1
        %v1113 = vrot.slane %v572, 1
        %v1114 = vsel %vm1099, %v1112, %v1113
        %v1115 = vrot.slane %v1078, 1
        %v1116 = vrot.slane %v574, 1
        %v1117 = vsel %vm1099, %v1115, %v1116
        %v1118 = vrot.slane %v1080, 1
        %v1119 = vrot.slane %v576, 1
        %v1120 = vsel %vm1099, %v1118, %v1119
        %v1121 = vrot.slane %v1082, 1
        %v1122 = vrot.slane %v578, 1
        %v1123 = vsel %vm1099, %v1121, %v1122
        %s1124 = scalar_lea.vmem %s1, 16
        %v1125 = vld [vmem:[%s1124] sm:$0xf]
        %v1126 = vld [vmem:[%s1124 + $0x4] sm:$0x3]
        %v1129 = vunpack.c.l.b16 %v1125
        %v1130 = vunpack.c.l.b16 %v1126
        %v1131 = vpack.c.b16 %v1130, %v1129
        %v1133 = vsel %vm668, %v1102, 0
        %v1136 = vsel %vm668, %v1105, 0
        %v1139 = vsel %vm668, %v1108, 0
        %v1142 = vsel %vm668, %v1111, 0
        %v1145 = vsel %vm668, %v1114, 0
        %v1148 = vsel %vm668, %v1117, 0
        %v1151 = vsel %vm668, %v1120, 0
        %v1154 = vsel %vm668, %v1123, 0
        %v1157 = vsel %vm693, %v1131, 0
        %1159 = vmatprep.subr.bf16.mxu0 0
        %1160 = vmatpush1.bf16.msra.mxu0 %v1157
        %1161 = vmatprep.subr.bf16.mxu0 0
        %1162 = vmatpush1.bf16.msra.mxu0 0
        %1163 = vmatprep.subr.bf16.mxu0 0
        %1164 = vmatpush1.bf16.msra.mxu0 0
        %1165 = vmatprep.subr.bf16.mxu0 0
        %1166 = vmatpush1.bf16.msra.mxu0 0
        %1167 = vmatprep.subr.bf16.mxu0 0
        %1168 = vmatpush1.bf16.msra.mxu0 0
        %1169 = vmatprep.subr.bf16.mxu0 0
        %1170 = vmatpush1.bf16.msra.mxu0 0
        %1171 = vmatprep.subr.bf16.mxu0 0
        %1172 = vmatpush1.bf16.msra.mxu0 0
        %1173 = vmatprep.subr.bf16.mxu0 0
        %1174 = vmatpush1.bf16.msra.mxu0 0
        %1175 = vmatprep.subr.bf16.mxu0 0
        %1176 = vmatpush1.bf16.msra.mxu0 0
        %1177 = vmatprep.subr.bf16.mxu0 0
        %1178 = vmatpush1.bf16.msra.mxu0 0
        %1179 = vmatprep.subr.bf16.mxu0 0
        %1180 = vmatpush1.bf16.msra.mxu0 0
        %1181 = vmatprep.subr.bf16.mxu0 0
        %1182 = vmatpush1.bf16.msra.mxu0 0
        %1183 = vmatprep.subr.bf16.mxu0 0
        %1184 = vmatpush1.bf16.msra.mxu0 0
        %1185 = vmatprep.subr.bf16.mxu0 0
        %1186 = vmatpush1.bf16.msra.mxu0 0
        %1187 = vmatprep.subr.bf16.mxu0 0
        %1188 = vmatpush1.bf16.msra.mxu0 0
        %1189 = vmatprep.subr.bf16.mxu0 0
        %1190 = vmatpush1.bf16.msra.mxu0 0
        %1191 = vmatprep.mubr.bf16.mxu0 0
        %1192 = vmatmul.mubr.bf16.gmra.mrb[0].mxu0 %v1133
        %v1193 = vpop.f32.mrb[0].mxu0
        %v1194 = vadd.f32 0.0, %v1193
        %v1195 = vpop.f32.mrb[0].mxu0
        %v1196 = vpop.f32.mrb[0].mxu0
        %v1197 = vadd.f32 0.0, %v1196
        %v1198 = vpop.f32.mrb[0].mxu0
        %1199 = vmatprep.mubr.bf16.mxu0 0
        %1200 = vmatmul.mubr.bf16.gmra.mrb[0].mxu0 %v1136
        %v1201 = vpop.f32.mrb[0].mxu0
        %v1202 = vadd.f32 0.0, %v1201
        %v1203 = vpop.f32.mrb[0].mxu0
        %v1204 = vpop.f32.mrb[0].mxu0
        %v1205 = vadd.f32 0.0, %v1204
        %v1206 = vpop.f32.mrb[0].mxu0
        %1207 = vmatprep.mubr.bf16.mxu0 0
        %1208 = vmatmul.mubr.bf16.gmra.mrb[0].mxu0 %v1139
        %v1209 = vpop.f32.mrb[0].mxu0
        %v1210 = vadd.f32 0.0, %v1209
        %v1211 = vpop.f32.mrb[0].mxu0
        %v1212 = vpop.f32.mrb[0].mxu0
        %v1213 = vadd.f32 0.0, %v1212
        %v1214 = vpop.f32.mrb[0].mxu0
        %1215 = vmatprep.mubr.bf16.mxu0 0
        %1216 = vmatmul.mubr.bf16.gmra.mrb[0].mxu0 %v1142
        %v1217 = vpop.f32.mrb[0].mxu0
        %v1218 = vadd.f32 0.0, %v1217
        %v1219 = vpop.f32.mrb[0].mxu0
        %v1220 = vpop.f32.mrb[0].mxu0
        %v1221 = vadd.f32 0.0, %v1220
        %v1222 = vpop.f32.mrb[0].mxu0
        %1223 = vmatprep.mubr.bf16.mxu0 0
        %1224 = vmatmul.mubr.bf16.gmra.mrb[0].mxu0 %v1145
        %v1225 = vpop.f32.mrb[0].mxu0
        %v1226 = vadd.f32 0.0, %v1225
        %v1227 = vpop.f32.mrb[0].mxu0
        %v1228 = vpop.f32.mrb[0].mxu0
        %v1229 = vadd.f32 0.0, %v1228
        %v1230 = vpop.f32.mrb[0].mxu0
        %1231 = vmatprep.mubr.bf16.mxu0 0
        %1232 = vmatmul.mubr.bf16.gmra.mrb[0].mxu0 %v1148
        %v1233 = vpop.f32.mrb[0].mxu0
        %v1234 = vadd.f32 0.0, %v1233
        %v1235 = vpop.f32.mrb[0].mxu0
        %v1236 = vpop.f32.mrb[0].mxu0
        %v1237 = vadd.f32 0.0, %v1236
        %v1238 = vpop.f32.mrb[0].mxu0
        %1239 = vmatprep.mubr.bf16.mxu0 0
        %1240 = vmatmul.mubr.bf16.gmra.mrb[0].mxu0 %v1151
        %v1241 = vpop.f32.mrb[0].mxu0
        %v1242 = vadd.f32 0.0, %v1241
        %v1243 = vpop.f32.mrb[0].mxu0
        %v1244 = vpop.f32.mrb[0].mxu0
        %v1245 = vadd.f32 0.0, %v1244
        %v1246 = vpop.f32.mrb[0].mxu0
        %1247 = vmatprep.mubr.bf16.mxu0 0
        %1248 = vmatmul.mubr.bf16.gmra.mrb[0].mxu0 %v1154
        %v1249 = vpop.f32.mrb[0].mxu0
        %v1250 = vadd.f32 0.0, %v1249
        %v1251 = vpop.f32.mrb[0].mxu0
        %v1252 = vpop.f32.mrb[0].mxu0
        %v1253 = vadd.f32 0.0, %v1252
        %v1254 = vpop.f32.mrb[0].mxu0
        %1255 = vdwg.mxu0
        %v1256 = vadd.f32 %v853, %v1194
        %v1257 = vadd.f32 %v856, %v1197
        %v1258 = vadd.f32 %v861, %v1202
        %v1259 = vadd.f32 %v864, %v1205
        %v1260 = vadd.f32 %v869, %v1210
        %v1261 = vadd.f32 %v872, %v1213
        %v1262 = vadd.f32 %v877, %v1218
        %v1263 = vadd.f32 %v880, %v1221
        %v1264 = vadd.f32 %v885, %v1226
        %v1265 = vadd.f32 %v888, %v1229
        %v1266 = vadd.f32 %v893, %v1234
        %v1267 = vadd.f32 %v896, %v1237
        %v1268 = vadd.f32 %v901, %v1242
        %v1269 = vadd.f32 %v904, %v1245
        %v1270 = vadd.f32 %v909, %v1250
        %v1271 = vadd.f32 %v912, %v1253
        %v1272 = vsel %vm392, %v1256, 0.0
        %v1273 = vsel %vm392, %v1257, 0.0
        %v1274 = vadd.f32 %v1272, %v1273
        %v1275 = vsel %vm392, %v1258, 0.0
        %v1276 = vadd.f32 %v1274, %v1275
        %v1277 = vsel %vm392, %v1259, 0.0
        %v1278 = vadd.f32 %v1276, %v1277
        %v1279 = vsel %vm392, %v1260, 0.0
        %v1280 = vadd.f32 %v1278, %v1279
        %v1281 = vsel %vm392, %v1261, 0.0
        %v1282 = vadd.f32 %v1280, %v1281
        %v1283 = vsel %vm392, %v1262, 0.0
        %v1284 = vadd.f32 %v1282, %v1283
        %v1285 = vsel %vm392, %v1263, 0.0
        %v1286 = vadd.f32 %v1284, %v1285
        %v1287 = vsel %vm392, %v1264, 0.0
        %v1288 = vadd.f32 %v1286, %v1287
        %v1289 = vsel %vm392, %v1265, 0.0
        %v1290 = vadd.f32 %v1288, %v1289
        %v1291 = vsel %vm392, %v1266, 0.0
        %v1292 = vadd.f32 %v1290, %v1291
        %v1293 = vsel %vm392, %v1267, 0.0
        %v1294 = vadd.f32 %v1292, %v1293
        %v1295 = vsel %vm392, %v1268, 0.0
        %v1296 = vadd.f32 %v1294, %v1295
        %v1297 = vsel %vm392, %v1269, 0.0
        %v1298 = vadd.f32 %v1296, %v1297
        %v1299 = vsel %vm392, %v1270, 0.0
        %v1300 = vadd.f32 %v1298, %v1299
        %v1301 = vsel %vm392, %v1271, 0.0
        %v1302 = vadd.f32 %v1300, %v1301
        %v1303 = vrot.slane %v1302, 4
        %v1304 = vadd.f32 %v1302, %v1303
        %v1305 = vrot.slane %v1304, 2
        %v1306 = vadd.f32 %v1304, %v1305
        %v1307 = vrot.slane %v1306, 1
        %v1308 = vadd.f32 %v1306, %v1307
        %v1309 = vmul.f32 %v1256, %v1256
        %v1310 = vmul.f32 %v1257, %v1257
        %v1311 = vmul.f32 %v1258, %v1258
        %v1312 = vmul.f32 %v1259, %v1259
        %v1313 = vmul.f32 %v1260, %v1260
        %v1314 = vmul.f32 %v1261, %v1261
        %v1315 = vmul.f32 %v1262, %v1262
        %v1316 = vmul.f32 %v1263, %v1263
        %v1317 = vmul.f32 %v1264, %v1264
        %v1318 = vmul.f32 %v1265, %v1265
        %v1319 = vmul.f32 %v1266, %v1266
        %v1320 = vmul.f32 %v1267, %v1267
        %v1321 = vmul.f32 %v1268, %v1268
        %v1322 = vmul.f32 %v1269, %v1269
        %v1323 = vmul.f32 %v1270, %v1270
        %v1324 = vmul.f32 %v1271, %v1271
        %v1325 = vsel %vm392, %v1309, 0.0
        %v1326 = vsel %vm392, %v1310, 0.0
        %v1327 = vadd.f32 %v1325, %v1326
        %v1328 = vsel %vm392, %v1311, 0.0
        %v1329 = vadd.f32 %v1327, %v1328
        %v1330 = vsel %vm392, %v1312, 0.0
        %v1331 = vadd.f32 %v1329, %v1330
        %v1332 = vsel %vm392, %v1313, 0.0
        %v1333 = vadd.f32 %v1331, %v1332
        %v1334 = vsel %vm392, %v1314, 0.0
        %v1335 = vadd.f32 %v1333, %v1334
        %v1336 = vsel %vm392, %v1315, 0.0
        %v1337 = vadd.f32 %v1335, %v1336
        %v1338 = vsel %vm392, %v1316, 0.0
        %v1339 = vadd.f32 %v1337, %v1338
        %v1340 = vsel %vm392, %v1317, 0.0
        %v1341 = vadd.f32 %v1339, %v1340
        %v1342 = vsel %vm392, %v1318, 0.0
        %v1343 = vadd.f32 %v1341, %v1342
        %v1344 = vsel %vm392, %v1319, 0.0
        %v1345 = vadd.f32 %v1343, %v1344
        %v1346 = vsel %vm392, %v1320, 0.0
        %v1347 = vadd.f32 %v1345, %v1346
        %v1348 = vsel %vm392, %v1321, 0.0
        %v1349 = vadd.f32 %v1347, %v1348
        %v1350 = vsel %vm392, %v1322, 0.0
        %v1351 = vadd.f32 %v1349, %v1350
        %v1352 = vsel %vm392, %v1323, 0.0
        %v1353 = vadd.f32 %v1351, %v1352
        %v1354 = vsel %vm392, %v1324, 0.0
        %v1355 = vadd.f32 %v1353, %v1354
        %v1356 = vrot.slane %v1355, 4
        %v1357 = vadd.f32 %v1355, %v1356
        %v1358 = vrot.slane %v1357, 2
        %v1359 = vadd.f32 %v1357, %v1358
        %v1360 = vrot.slane %v1359, 1
        %v1361 = vadd.f32 %v1359, %v1360
        %vm1362 = vcmask 1040384
        %v1363 = vsel %vm1362, %v1308, %v1361
        %p1364 = scmp.eq.s32.totalorder %s21, 0
        // Predicated region
        $region29: #{tpu_custom_call.1} parent=27 // pred_check
          %p1365 = pneg %p1364
        $region30: #{tpu_custom_call.1} parent=27 // pred_check_branch
          %1367 = sbr.rel (%p1365) target = $region32
        $region31: #{tpu_custom_call.1} parent=27 // pred_region
          %vm1368 = vcmask 58368
          %1369 = vst.msk [vmem:[%s148] sm:$0x3] %vm1368, 0.0
        $region32: #{tpu_custom_call.1} parent=27 // pred_fallthru
          _
        %v1370 = vld [vmem:[%s148] sm:$0x3]
        %v1371 = vadd.f32 %v1370, %v1363
        %vm1372 = vcmask 58368
        %1373 = vst.msk [vmem:[%s148] sm:$0x3] %vm1372, %v1371
        %s1374 = sand.u32 %s83, 1
        %s1375 = scalar_lea.sflag [#allocation3], %s1374
        %s1376 = sand.u32 %s83, 1
        %s1377 = smul.addr %s1376, 2
        %s1378 = scalar_lea.vmem [#allocation2], %s1377
        // Predicated region
        $region33: #{tpu_custom_call.1} parent=27 // pred_check
          %p1379 = pneg %p93
        $region34: #{tpu_custom_call.1} parent=27 // pred_check_branch
          %1381 = sbr.rel (%p1379) target = $region36
        $region35: #{tpu_custom_call.1} parent=27 // pred_region
          %s1383 = ssub.s32 32, 32
          %1384 = vsyncadd %s1375, %s1383
          %s1385 = smul.addr %s20, 32
          %s1386 = scalar_lea.hbm %s2, %s1385
          %s1388 = sshll.u32 %s1378, 4
          %s1389 = int_to_ptr.vmem [resolvable:$true] %s1388
          %1391 = dma.vmem_to_hbm [thread:$0]  %s1389, 32, %s1386, %s1375
        $region36: #{tpu_custom_call.1} parent=27 // pred_fallthru
          _
      $region28: #{tpu_custom_call.1} parent=5 // pred_fallthru
        _
      %p1392 = scmp.le.s32.totalorder 2, %s11
      // Predicated region
      $region37: #{tpu_custom_call.1} parent=5 // pred_check
        %p1393 = pneg %p1392
      $region38: #{tpu_custom_call.1} parent=5 // pred_check_branch
        %1395 = sbr.rel (%p1393) target = $region40
      $region39: #{tpu_custom_call.1} parent=5 // pred_region
        %s1396 = ssub.s32 %s11, 2
        // Predicated region
        $region41: #{tpu_custom_call.1} parent=39 // pred_check
          %p1397 = pneg %p99
        $region42: #{tpu_custom_call.1} parent=39 // pred_check_branch
          %1399 = sbr.rel (%p1397) target = $region44
        $region43: #{tpu_custom_call.1} parent=39 // pred_region
          %s1400 = sand.u32 %s84, 1
          %s1401 = scalar_lea.sflag [#allocation3], %s1400
          %s1402 = sand.u32 %s84, 1
          %s1403 = smul.addr %s1402, 2
          %s1404 = scalar_lea.vmem [#allocation2], %s1403
          %1405 = dma.done %s1401, 32
        $region44: #{tpu_custom_call.1} parent=39 // pred_fallthru
          _
      $region40: #{tpu_custom_call.1} parent=5 // pred_fallthru
        _
    $region6: #{tpu_custom_call.1} parent=1 // loop_footer
      %s15 = sadd.s32 1, %s11
    $region7: #{tpu_custom_call.1} parent=1 // loop_footer_branch
      %10 = sbr.rel target = $region3
    $region8: #{tpu_custom_call.1} parent=1 // loop_exit
      _
    %1406 = vsyncpa [#allocation3], 1
    %s1407 = scalar_lea.sflag [#allocation3], 1
    %1408 = vsyncpa %s1407, 1

</llo_original>
